<compile_context>
chip_gen: v5e
topology: v5e:2x2
jax: 0.10.0
libtpu: 0.0.40
codegen_flags: <defaults>
</compile_context>

<pallas_src>
import functools

import numpy as np
import jax
import jax.numpy as jnp
from jax.experimental import pallas as pl
from jax.experimental.pallas import tpu as pltpu


# --------------------------------------------------------------------------------------
# helpers
# --------------------------------------------------------------------------------------

def _sublane(dtype):
    """Sublane multiple for this dtype (f32: 8, bf16: 16, int8/fp8: 32)."""
    return {4: 8, 2: 16, 1: 32}.get(jnp.dtype(dtype).itemsize, 8)


def _tpu_budget():
    """(input_tile_bytes, vmem_limit_bytes, mxu_out_lane_cap) for the current TPU generation."""
    try:
        kind = jax.devices()[0].device_kind.lower()
    except Exception:
        kind = ""
    if any(t in kind for t in ("v7", "7x", "tpu7")):      # 64 MiB VMEM, 2 TCs, ~3.2 TB/s
        return 5 * 2**20, 48 * 2**20, 256
    if any(t in kind for t in ("v2", "v3")):              # small-VMEM legacy parts
        return 1 * 2**20, 12 * 2**20, 256
    if any(t in kind for t in ("v5e", "v5 lite", "v5lite")):   # weak f32 MXU roofline
        return 8 * 2**20, 64 * 2**20, 128
    return 8 * 2**20, 64 * 2**20, 256                     # v4 / v5p / v6e class (128 MiB VMEM)


def _pick_rows(total_rows, row_bytes, unit, target_bytes):
    """Largest row tile (multiple of `unit`) near target_bytes; prefer >=2 balanced grid steps."""
    rows = max(unit, (target_bytes // max(1, row_bytes)) // unit * unit)
    rows = min(rows, total_rows)
    if rows >= total_rows:
        if total_rows >= 2 * unit:
            # Split so the 1-D grid has >= 2 steps (v7x dual-TC sharding / pipelining).
            rows = pl.cdiv(pl.cdiv(total_rows, 2), unit) * unit
        else:
            return total_rows             # full-extent block (always legal)
    return max(unit, (rows // unit) * unit)


# --------------------------------------------------------------------------------------
# kernels
# --------------------------------------------------------------------------------------

def _shift_left(x, s):
    """Cyclic left shift along lanes: out[:, l] = x[:, (l + s) % L] (unambiguous semantics)."""
    if s == 0:
        return x
    return jnp.concatenate([x[:, s:], x[:, :s]], axis=1)


def _maxpool_kernel_mxu(x_ref, sel_ref, o_ref, *, k, w):
    """Lane-dense path.

    x_ref  : (TR, g*k*W)  -- each 2-D row holds g pooling windows' worth of k stacked input rows
    sel_ref: (g*k*W, g*Wo) one-hot compaction matrix (exactly one 1 per output column)
    o_ref  : (TR, g*Wo)
    """
    x = x_ref[...]
    # Horizontal taps: max over the k adjacent lanes of each window (result at the window's lane).
    m = x
    for t in range(1, k):
        m = jnp.maximum(m, _shift_left(x, t))
    # Vertical taps: row j of the window sits j*W lanes further right.
    h = m
    for j in range(1, k):
        h = jnp.maximum(h, _shift_left(m, j * w))
    # Compact winners (lanes p*k*W + c*k) into contiguous lanes on the MXU; one-hot -> exact.
    out = jnp.dot(h, sel_ref[...], preferred_element_type=jnp.float32)
    o_ref[...] = out.astype(o_ref.dtype)


def _pool_rows(x, k, n_out):
    """Max over groups of `k` consecutive rows (sublane axis), stride k."""
    ncols = x.shape[-1]
    out = jax.lax.slice(x, (0, 0), ((n_out - 1) * k + 1, ncols), strides=(k, 1))
    for j in range(1, k):
        tap = jax.lax.slice(x, (j, 0), (j + (n_out - 1) * k + 1, ncols), strides=(k, 1))
        out = jnp.maximum(out, tap)
    return out


def _maxpool_kernel_xpose(x_ref, o_ref, *, k):
    """Transpose fallback (wide W / non-float dtypes).

    x_ref: (TRo*k, W)   o_ref: (TRo, Wo)   (trailing W - Wo*k columns are simply never read)
    """
    tro, wo = o_ref.shape
    x = x_ref[...]
    r = _pool_rows(x, k, tro)        # H-pool: sublane stride-k taps       (tro, W)
    t = r.T                          # put W on the sublane axis           (W, tro)
    c = _pool_rows(t, k, wo)         # W-pool: sublane stride-k taps       (wo, tro)
    o_ref[...] = c.T


# --------------------------------------------------------------------------------------
# wrapper
# --------------------------------------------------------------------------------------

@functools.partial(jax.jit, static_argnames=("k", "s"))
def multistream_maxpool2d(x, k=2, s=2):
    """Equivalent of MultiStreamMaxPool2d.forward(x) for NCHW input."""
    if s != k:
        # TODO(synk): stride != kernel_size has no fused Pallas path here; the module default (k == s) is supported.
        raise NotImplementedError("Pallas MultiStreamMaxPool2d requires s == k")

    N, C, H, W = x.shape
    # PyTorch MaxPool2d: floor((dim - k) / s) + 1, no padding / dilation.
    Ho = (H - k) // s + 1
    Wo = (W - k) // s + 1
    if Ho <= 0 or Wo <= 0:
        raise ValueError(f"Pooling window {k} larger than spatial dims {(H, W)}")

    # Only ragged H needs a host-side trim (one copy); ragged W is handled inside the kernel
    # by never selecting the trailing W - Wo*k columns -- no extra HBM traffic.
    if H != Ho * k:
        x = x[:, :, : Ho * k, :]

    tile_target, vmem_limit, mxu_out_cap = _tpu_budget()
    itemsize = jnp.dtype(x.dtype).itemsize
    sub = _sublane(x.dtype)
    R_out = N * C * Ho

    # Lane-dense grouping: fold g pooled rows per 2-D row so lanes stay ~>=256 wide for narrow W.
    lane_cap = 512
    g = 1
    g_hi = max(1, min(lane_cap // (k * W), R_out))
    for cand in range(g_hi, 0, -1):
        if R_out % cand == 0 and (R_out // cand >= 8 or cand == 1):
            g = cand
            break
    # Use the MXU compaction only when the one-hot matmul stays well under the MXU roofline
    # (g*Wo output lanes -> ~g*Wo/2 f32 flop per input byte) and the dtype has an MXU path.
    use_mxu = bool(jnp.issubdtype(x.dtype, jnp.floating)) and (g * Wo <= mxu_out_cap)

    in_bytes = R_out * k * W * itemsize
    out_bytes = R_out * Wo * itemsize
    cost = pl.CostEstimate(
        flops=R_out * Wo * (k * k - 1) + (2 * R_out * k * W * g * Wo if use_mxu else 0),
        transcendentals=0,
        bytes_accessed=in_bytes + out_bytes,
    )
    cparams = pltpu.CompilerParams(
        dimension_semantics=("parallel",),
        vmem_limit_bytes=vmem_limit,
    )

    if use_mxu:
        R = R_out // g
        L = g * k * W
        gWo = g * Wo
        x2 = x.reshape(R, L)                       # free view of the contiguous NCHW array
        # One-hot compaction matrix: sel[p*k*W + c*k, p*Wo + c] = 1  (built host-side, constant).
        o_idx = np.arange(gWo)
        src = (o_idx // Wo) * (k * W) + (o_idx % Wo) * k
        sel_np = np.zeros((L, gWo), dtype=np.float32)
        sel_np[src, o_idx] = 1.0
        sel = jnp.asarray(sel_np, dtype=x.dtype)

        tr = _pick_rows(R, L * itemsize, sub, tile_target)
        grid_r = pl.cdiv(R, tr)
        out2 = pl.pallas_call(
            functools.partial(_maxpool_kernel_mxu, k=k, w=W),
            out_shape=jax.ShapeDtypeStruct((R, gWo), x.dtype),
            grid=(grid_r,),
            in_specs=[
                pl.BlockSpec((tr, L), lambda r: (r, 0)),
                pl.BlockSpec((L, gWo), lambda r: (0, 0)),   # constant block, fetched once
            ],
            out_specs=pl.BlockSpec((tr, gWo), lambda r: (r, 0)),
            compiler_params=cparams,
            cost_estimate=cost,
        )(x2, sel)
        return out2.reshape(N, C, Ho, Wo)          # free: splits leading dims only

    # ---- transpose fallback: (N*C*Ho*k, W) view, H-pool on sublanes, W-pool via transposes ----
    R_in = R_out * k
    x2 = x.reshape(R_in, W)                        # free view of the contiguous NCHW array
    unit = sub * k                                 # keep windows & sublane tiles inside one block
    tr_in = _pick_rows(R_in, W * itemsize, unit, tile_target)
    tro = tr_in // k                               # exact: tr_in is a multiple of k (or == R_in)
    grid_r = pl.cdiv(R_out, tro)
    out2 = pl.pallas_call(
        functools.partial(_maxpool_kernel_xpose, k=k),
        out_shape=jax.ShapeDtypeStruct((R_out, Wo), x.dtype),
        grid=(grid_r,),
        in_specs=[pl.BlockSpec((tr_in, W), lambda r: (r, 0))],
        out_specs=pl.BlockSpec((tro, Wo), lambda r: (r, 0)),
        compiler_params=cparams,
        cost_estimate=cost,
    )(x2)
    return out2.reshape(N, C, Ho, Wo)


class MultiStreamMaxPool2d:
    """Multi-stream MaxPool2d (Pallas TPU). Mirrors the PyTorch module's forward."""

    def __init__(self, k=2, s=2):
        self.k = k
        self.s = s

    def __call__(self, x):
        return multistream_maxpool2d(x, k=self.k, s=self.s)


def _reference(x, k=2, s=2):
    return jax.lax.reduce_window(
        x,
        -jnp.inf,
        jax.lax.max,
        window_dimensions=(1, 1, k, k),
        window_strides=(1, 1, s, s),
        padding="VALID",
    )


if __name__ == "__main__":
    key = jax.random.PRNGKey(0)
    k1, k2, k3, k4 = jax.random.split(key, 4)
    pool = MultiStreamMaxPool2d(k=2, s=2)

    # 1) Primary: small NCHW input (lane-dense MXU path).
    x = jax.random.normal(k1, (2, 4, 16, 16), dtype=jnp.float32)
    y = jax.block_until_ready(pool(x))
    assert y.shape == (2, 4, 8, 8), y.shape
    assert jnp.allclose(y, _reference(x)), "Pallas maxpool mismatch (f32)"

    # 2) Odd spatial dims: floor-mode H trim + in-kernel restriction of ragged W (no extra copy).
    x_odd = jax.random.normal(k2, (1, 3, 9, 13), dtype=jnp.float32)
    y_odd = jax.block_until_ready(pool(x_odd))
    assert y_odd.shape == (1, 3, 4, 6), y_odd.shape
    assert jnp.allclose(y_odd, _reference(x_odd)), "Pallas maxpool mismatch (odd dims)"

    # 3) bf16 exercises the packed-dtype layout on the MXU path (pooling + one-hot matmul are exact).
    x_bf = jax.random.normal(k3, (2, 4, 16, 16), dtype=jnp.float32).astype(jnp.bfloat16)
    y_bf = jax.block_until_ready(pool(x_bf))
    assert y_bf.dtype == jnp.bfloat16
    assert jnp.array_equal(
        y_bf.astype(jnp.float32), _reference(x_bf.astype(jnp.float32))
    ), "Pallas maxpool mismatch (bf16)"

    # 4) Wide W exercises the transpose fallback path.
    x_w = jax.random.normal(k4, (1, 2, 6, 516), dtype=jnp.float32)
    y_w = jax.block_until_ready(pool(x_w))
    assert y_w.shape == (1, 2, 3, 258), y_w.shape
    assert jnp.allclose(y_w, _reference(x_w)), "Pallas maxpool mismatch (wide W)"

    print("KERNEL_OK")
</pallas_src>

<mosaic_0001>
module attributes {stable_mosaic.version = 11 : i64} {
  func.func @_maxpool_kernel_mxu(%arg0: i32, %arg1: memref<8x256xf32, #tpu.memory_space<vmem>>, %arg2: memref<256x64xf32, #tpu.memory_space<vmem>>, %arg3: memref<8x64xf32, #tpu.memory_space<vmem>>) attributes {dimension_semantics = [#tpu.dimension_semantics<parallel>], iteration_bounds = array<i64: 1>, scalar_prefetch = 0 : i64, scratch_operands = 0 : i64, tpu.core_type = #tpu.core_type<tc>, window_params = [{transform_indices = @transform_0, window_bounds = array<i64: 8, 256>}, {pipeline_mode = #tpu.pipeline_mode<synchronous>, transform_indices = @transform_1, window_bounds = array<i64: 256, 64>}, {transform_indices = @transform_2, window_bounds = array<i64: 8, 64>}]} {
    %c0 = arith.constant 0 : index
    %c0_0 = arith.constant 0 : index
    %0 = vector.load %arg1[%c0, %c0_0] : memref<8x256xf32, #tpu.memory_space<vmem>>, vector<8x256xf32>
    %1 = vector.extract_strided_slice %0 {offsets = [0, 1], sizes = [8, 255], strides = [1, 1]} : vector<8x256xf32> to vector<8x255xf32>
    %2 = vector.extract_strided_slice %0 {offsets = [0, 0], sizes = [8, 1], strides = [1, 1]} : vector<8x256xf32> to vector<8x1xf32>
    %3 = tpu.concatenate %1, %2 in 1 : vector<8x255xf32>, vector<8x1xf32> -> vector<8x256xf32>
    %4 = arith.maximumf %0, %3 : vector<8x256xf32>
    %5 = vector.extract_strided_slice %4 {offsets = [0, 16], sizes = [8, 240], strides = [1, 1]} : vector<8x256xf32> to vector<8x240xf32>
    %6 = vector.extract_strided_slice %4 {offsets = [0, 0], sizes = [8, 16], strides = [1, 1]} : vector<8x256xf32> to vector<8x16xf32>
    %7 = tpu.concatenate %5, %6 in 1 : vector<8x240xf32>, vector<8x16xf32> -> vector<8x256xf32>
    %8 = arith.maximumf %4, %7 : vector<8x256xf32>
    %c0_1 = arith.constant 0 : index
    %c0_2 = arith.constant 0 : index
    %9 = vector.load %arg2[%c0_1, %c0_2] : memref<256x64xf32, #tpu.memory_space<vmem>>, vector<256x64xf32>
    %cst = arith.constant dense<0.000000e+00> : vector<8x64xf32>
    %10 = tpu.matmul %8, %9, %cst {dimension_numbers = #tpu.dot_dimension_numbers<[1], [0], [0], [1], [0, 0, 1, 1], [], []>} : vector<8x256xf32>, vector<256x64xf32>, vector<8x64xf32> -> vector<8x64xf32>
    %c0_3 = arith.constant 0 : index
    %c0_4 = arith.constant 0 : index
    %11 = vector.load %arg3[%c0_3, %c0_4] : memref<8x64xf32, #tpu.memory_space<vmem>>, vector<8x64xf32>
    tpu.vector_store %arg3[%c0_3, %c0_4], %10 {strides = array<i32>} : memref<8x64xf32, #tpu.memory_space<vmem>>, vector<8x64xf32>,
    return
  }
  func.func @transform_0(%arg0: i32) -> (i32, i32) {
    %c0_i32 = arith.constant 0 : i32
    %c0_i32_0 = arith.constant 0 : i32
    return %arg0, %c0_i32 : i32, i32
  }
  func.func @transform_1(%arg0: i32) -> (i32, i32) {
    %c0_i32 = arith.constant 0 : i32
    %c0_i32_0 = arith.constant 0 : i32
    %c0_i32_1 = arith.constant 0 : i32
    return %c0_i32, %c0_i32_0 : i32, i32
  }
  func.func @transform_2(%arg0: i32) -> (i32, i32) {
    %c0_i32 = arith.constant 0 : i32
    %c0_i32_0 = arith.constant 0 : i32
    return %arg0, %c0_i32 : i32, i32
  }
}

</mosaic_0001>

<llo_original>
// kernel: multistream_maxpool2d.1
$region0: #{multistream_maxpool2d.1}
  #allocation0 [shape = 'u32[]', space=smem, size = 0x4, offset = 0x4, fixed_abs, tag = 'smem constant byte address 0x4 - core index']
  #allocation1 [shape = 'u32[72,128]{1,0:T(1,128)}', space=vmem, size = 0x9000, scoped, tag = 'internal scratch']
  %s0 = inlined_call_operand.vmem [shape: f32[8,256], index: 0, kind: input, shape index: {}]
  %s1 = inlined_call_operand.hbm [shape: f32[256,64], index: 1, kind: input, shape index: {}]
  %s2 = inlined_call_operand.vmem [shape: f32[8,64], index: 2, kind: output, shape index: {}]
  %s3 = sld [smem:[#allocation0]]
  $region22: #{multistream_maxpool2d.1} parent=0
    _
  %s5 = ssub.s32 1, %s3
  %s6 = scalar_select 0, %s5, %s3
  $region1: #{multistream_maxpool2d.1} parent=0
    #allocation2 [shape = 'u8[131072]{0}', space=vmem, size = 0x20000, scoped, tag = 'input window, operand 1, single buffered']
    #allocation3 [shape = 's32[1]{0}', space=sflag, size = 0x4, scoped, tag = 'scoped memory for multistream_maxpool2d.1']
    %7 = vsyncpa [#allocation3], 0
    // Predicated region
    $region2: #{multistream_maxpool2d.1} parent=1 // pred_check
      _
    $region3: #{multistream_maxpool2d.1} parent=1 // pred_check_branch
      %9 = sbr.rel (0) target = $region5
    $region4: #{multistream_maxpool2d.1} parent=1 // pred_region
      _
    $region5: #{multistream_maxpool2d.1} parent=1 // pred_fallthru
      _
    // Predicated region
    $region6: #{multistream_maxpool2d.1} parent=1 // pred_check
      _
    $region7: #{multistream_maxpool2d.1} parent=1 // pred_check_branch
      %11 = sbr.rel (0) target = $region9
    $region8: #{multistream_maxpool2d.1} parent=1 // pred_region
      %13 = vsyncadd [#allocation3], 0
      %s14 = sshll.u32 %s1, 4
      %s15 = int_to_ptr.hbm [resolvable:$true] %s14
      %s16 = sshll.u32 [#allocation2], 4
      %s17 = int_to_ptr.vmem [resolvable:$true] %s16
      %22 = dma.hbm_to_vmem [thread:$0]  %s15, 4096, %s17, [#allocation3], 128, 128, 8
    $region9: #{multistream_maxpool2d.1} parent=1 // pred_fallthru
      _
    // Predicated region
    $region10: #{multistream_maxpool2d.1} parent=1 // pred_check
      _
    $region11: #{multistream_maxpool2d.1} parent=1 // pred_check_branch
      %24 = sbr.rel (0) target = $region13
    $region12: #{multistream_maxpool2d.1} parent=1 // pred_region
      %26 = dma.done [#allocation3], 4096
    $region13: #{multistream_maxpool2d.1} parent=1 // pred_fallthru
      _
    %v27 = vld [vmem:[%s0] sm:$0xff]
    %v28 = vld [vmem:[%s0 + $0x8] sm:$0xff]
    %31 = vrot.lane.b32.xlu0 %v27, 127
    %v32 = vpop.permute.xlu0 %31
    %33 = vrot.lane.b32.xlu0 %v28, 127
    %v34 = vpop.permute.xlu0 %33
    %vm35 = vcmask 1039360
    %v36 = vsel %vm35, %v32, %v34
    %v40 = vsel %vm35, %v34, %v32
    %v41 = vmax.f32 %v27, %v36
    %v42 = vmax.f32 %v28, %v40
    %45 = vrot.lane.b32.xlu0 %v41, 112
    %v46 = vpop.permute.xlu0 %45
    %47 = vrot.lane.b32.xlu0 %v42, 112
    %v48 = vpop.permute.xlu0 %47
    %vm49 = vcmask 916480
    %v50 = vsel %vm49, %v46, %v48
    %v54 = vsel %vm49, %v48, %v46
    %v55 = vmax.f32 %v41, %v50
    %v56 = vmax.f32 %v42, %v54
    %v57 = vld [vmem:[#allocation2] sm:$0xff]
    %v58 = vld [vmem:[#allocation2 + $0x8] sm:$0xff]
    %v59 = vld [vmem:[#allocation2 + $0x10] sm:$0xff]
    %v60 = vld [vmem:[#allocation2 + $0x18] sm:$0xff]
    %v61 = vld [vmem:[#allocation2 + $0x20] sm:$0xff]
    %v62 = vld [vmem:[#allocation2 + $0x28] sm:$0xff]
    %v63 = vld [vmem:[#allocation2 + $0x30] sm:$0xff]
    %v64 = vld [vmem:[#allocation2 + $0x38] sm:$0xff]
    %v65 = vld [vmem:[#allocation2 + $0x40] sm:$0xff]
    %v66 = vld [vmem:[#allocation2 + $0x48] sm:$0xff]
    %v67 = vld [vmem:[#allocation2 + $0x50] sm:$0xff]
    %v68 = vld [vmem:[#allocation2 + $0x58] sm:$0xff]
    %v69 = vld [vmem:[#allocation2 + $0x60] sm:$0xff]
    %v70 = vld [vmem:[#allocation2 + $0x68] sm:$0xff]
    %v71 = vld [vmem:[#allocation2 + $0x70] sm:$0xff]
    %v72 = vld [vmem:[#allocation2 + $0x78] sm:$0xff]
    %v73 = vld [vmem:[#allocation2 + $0x80] sm:$0xff]
    %v74 = vld [vmem:[#allocation2 + $0x88] sm:$0xff]
    %v75 = vld [vmem:[#allocation2 + $0x90] sm:$0xff]
    %v76 = vld [vmem:[#allocation2 + $0x98] sm:$0xff]
    %v77 = vld [vmem:[#allocation2 + $0xa0] sm:$0xff]
    %v78 = vld [vmem:[#allocation2 + $0xa8] sm:$0xff]
    %v79 = vld [vmem:[#allocation2 + $0xb0] sm:$0xff]
    %v80 = vld [vmem:[#allocation2 + $0xb8] sm:$0xff]
    %v81 = vld [vmem:[#allocation2 + $0xc0] sm:$0xff]
    %v82 = vld [vmem:[#allocation2 + $0xc8] sm:$0xff]
    %v83 = vld [vmem:[#allocation2 + $0xd0] sm:$0xff]
    %v84 = vld [vmem:[#allocation2 + $0xd8] sm:$0xff]
    %v85 = vld [vmem:[#allocation2 + $0xe0] sm:$0xff]
    %v86 = vld [vmem:[#allocation2 + $0xe8] sm:$0xff]
    %v87 = vld [vmem:[#allocation2 + $0xf0] sm:$0xff]
    %v88 = vld [vmem:[#allocation2 + $0xf8] sm:$0xff]
    %89 = vmatpush.msra.mxu0 %v72
    %90 = vmatpush.msra.mxu0 %v71
    %91 = vmatpush.msra.mxu0 %v70
    %92 = vmatpush.msra.mxu0 %v69
    %93 = vmatpush.msra.mxu0 %v68
    %94 = vmatpush.msra.mxu0 %v67
    %95 = vmatpush.msra.mxu0 %v66
    %96 = vmatpush.msra.mxu0 %v65
    %97 = vmatpush.msra.mxu0 %v64
    %98 = vmatpush.msra.mxu0 %v63
    %99 = vmatpush.msra.mxu0 %v62
    %100 = vmatpush.msra.mxu0 %v61
    %101 = vmatpush.msra.mxu0 %v60
    %102 = vmatpush.msra.mxu0 %v59
    %103 = vmatpush.msra.mxu0 %v58
    %104 = vmatpush.msra.mxu0 %v57
    %105 = vmatmul.f32.gmra.mxu0 %v55
    %v106 = vpop.f32.mrf.mxu0
    %v107 = vadd.f32 0.0, %v106
    %108 = vdwg.mxu0
    %109 = vmatpush.msra.mxu0 %v88
    %110 = vmatpush.msra.mxu0 %v87
    %111 = vmatpush.msra.mxu0 %v86
    %112 = vmatpush.msra.mxu0 %v85
    %113 = vmatpush.msra.mxu0 %v84
    %114 = vmatpush.msra.mxu0 %v83
    %115 = vmatpush.msra.mxu0 %v82
    %116 = vmatpush.msra.mxu0 %v81
    %117 = vmatpush.msra.mxu0 %v80
    %118 = vmatpush.msra.mxu0 %v79
    %119 = vmatpush.msra.mxu0 %v78
    %120 = vmatpush.msra.mxu0 %v77
    %121 = vmatpush.msra.mxu0 %v76
    %122 = vmatpush.msra.mxu0 %v75
    %123 = vmatpush.msra.mxu0 %v74
    %124 = vmatpush.msra.mxu0 %v73
    %125 = vmatmul.f32.gmra.mxu0 %v56
    %v126 = vpop.f32.mrf.mxu0
    %v127 = vadd.f32 %v107, %v126
    %128 = vdwg.mxu0
    %vm129 = vcmask 523264
    %130 = vst.msk [vmem:[%s2] sm:$0xff] %vm129, %v127
    // Predicated region
    $region14: #{multistream_maxpool2d.1} parent=1 // pred_check
      _
    $region15: #{multistream_maxpool2d.1} parent=1 // pred_check_branch
      %132 = sbr.rel (0) target = $region17
    $region16: #{multistream_maxpool2d.1} parent=1 // pred_region
      _
    $region17: #{multistream_maxpool2d.1} parent=1 // pred_fallthru
      _
    // Predicated region
    $region18: #{multistream_maxpool2d.1} parent=1 // pred_check
      _
    $region19: #{multistream_maxpool2d.1} parent=1 // pred_check_branch
      %134 = sbr.rel (0) target = $region21
    $region20: #{multistream_maxpool2d.1} parent=1 // pred_region
      _
    $region21: #{multistream_maxpool2d.1} parent=1 // pred_fallthru
      _
    %135 = vsyncpa [#allocation3], 1

</llo_original>
